<compile_context>
chip_gen: v7x
topology: tpu7x:2x2x1
jax: 0.10.0
libtpu: 0.0.40
codegen_flags: <defaults>
</compile_context>

<pallas_src>
import jax
import jax.numpy as jnp
import numpy as np
from jax import lax
from jax.experimental import pallas as pl
from jax.experimental.pallas import tpu as pltpu


def neural_cf_kernel(uid_ref, iid_ref, uf_hbm, if_hbm, out_ref,
                     u_buf, i_buf, sems):
    """One grid step == one tile of `tile_b` batch rows.

    uid_ref / iid_ref : SMEM (num_tiles, tile_b) int32, scalar-prefetched ids.
    uf_hbm / if_hbm   : full factor tables left in HBM (memory_space=pl.ANY).
    out_ref           : (tile_b, 1) f32 output block.
    u_buf / i_buf     : (tile_b, n_factors) VMEM gather scratch.
    sems              : (2,) DMA semaphores (user table / item table).
    """
    t = pl.program_id(0)
    tile_b = u_buf.shape[0]
    u_sem = sems.at[0]
    i_sem = sems.at[1]

    # ---- gather --------------------------------------------------------
    # Issue every row fetch for both tables up front so the maximum number of
    # tiny row DMAs is in flight simultaneously (hardware queue depth is the
    # only cap; issue simply back-pressures).  All scalar id reads happen
    # before any .wait() (keeps SMEM sst->sld forwarding intact).
    def issue(j, carry):
        u_id = uid_ref[t, j]
        i_id = iid_ref[t, j]
        pltpu.make_async_copy(uf_hbm.at[pl.ds(u_id, 1)],
                              u_buf.at[pl.ds(j, 1)], u_sem).start()
        pltpu.make_async_copy(if_hbm.at[pl.ds(i_id, 1)],
                              i_buf.at[pl.ds(j, 1)], i_sem).start()
        return carry

    lax.fori_loop(0, tile_b, issue, 0)

    # Retire all copies before touching the scratch.  A wait only needs the
    # semaphore plus the per-copy byte count (all copies are the same size),
    # so same-shaped dummy refs are used for the wait descriptors.
    def drain(j, carry):
        pltpu.make_async_copy(uf_hbm.at[pl.ds(0, 1)],
                              u_buf.at[pl.ds(0, 1)], u_sem).wait()
        pltpu.make_async_copy(if_hbm.at[pl.ds(0, 1)],
                              i_buf.at[pl.ds(0, 1)], i_sem).wait()
        return carry

    lax.fori_loop(0, tile_b, drain, 0)

    # ---- compute -------------------------------------------------------
    # One vectorized multiply (VPU) + one lane reduce (XLU) for the whole
    # tile, in f32 — exact PyTorch semantics, no MXU truncation risk.
    prod = u_buf[...] * i_buf[...]                     # (tile_b, n_factors)
    out_ref[...] = jnp.sum(prod, axis=-1, keepdims=True).astype(out_ref.dtype)


def neural_cf_forward(user, item, user_factors, item_factors, *, tile_b=None):
    """(user_factors[user] * item_factors[item]).sum(1) -> (B,) float32."""
    b = int(user.shape[0])
    n_users, n_factors = user_factors.shape
    n_items, n_factors_i = item_factors.shape
    assert n_factors_i == n_factors

    # One grid step handles tile_b rows.  Gather scratch is only
    # 2 * tile_b * n_factors * 4 B (~80 KiB at tile_b=512), trivially within
    # VMEM on v5e/v6e (128 MiB) and v7x (64 MiB), and large tiles amortize the
    # per-grid-step overhead.
    if tile_b is None:
        tile_b = 512 if b >= 512 else b
    num_tiles = pl.cdiv(b, tile_b)
    b_pad = num_tiles * tile_b

    # Contract: ids must be in range (torch nn.Embedding raises on OOB).  The
    # clip is a safety net so a bad id can never become an OOB gather DMA.
    uids = jnp.clip(user.astype(jnp.int32), 0, n_users - 1)
    iids = jnp.clip(item.astype(jnp.int32), 0, n_items - 1)
    if b_pad != b:
        uids = jnp.pad(uids, (0, b_pad - b))   # padded rows fetch row 0 and
        iids = jnp.pad(iids, (0, b_pad - b))   # are sliced off below.
    # Dense 2-D SMEM layout for the prefetched ids.
    # TODO(synk): for batches >~100K the ids (8B/row total) no longer fit
    # SMEM; they would need to be tiled from HBM instead of scalar-prefetched.
    uids = uids.reshape(num_tiles, tile_b)
    iids = iids.reshape(num_tiles, tile_b)

    grid_spec = pltpu.PrefetchScalarGridSpec(
        num_scalar_prefetch=2,                   # uids, iids -> SMEM
        grid=(num_tiles,),
        in_specs=[
            pl.BlockSpec(memory_space=pl.ANY),   # user_factors stays in HBM
            pl.BlockSpec(memory_space=pl.ANY),   # item_factors stays in HBM
        ],
        out_specs=pl.BlockSpec((tile_b, 1), lambda t, u, i: (t, 0)),
        scratch_shapes=[
            pltpu.VMEM((tile_b, n_factors), user_factors.dtype),
            pltpu.VMEM((tile_b, n_factors), item_factors.dtype),
            pltpu.SemaphoreType.DMA((2,)),
        ],
    )

    out = pl.pallas_call(
        neural_cf_kernel,
        out_shape=jax.ShapeDtypeStruct((b_pad, 1), jnp.float32),
        grid_spec=grid_spec,
        compiler_params=pltpu.CompilerParams(
            # Batch tiles are fully independent; "parallel" lets the v7x
            # megacore split tiles across its two TensorCores (measured no-op
            # on single-core v5e/v6e, but harmless there).
            dimension_semantics=("parallel",)),
    )(uids, iids, user_factors, item_factors)

    return out.reshape(b_pad)[:b]


if __name__ == "__main__":
    # Small shapes consistent with the module (n_factors default = 20).
    n_users, n_items, n_factors = 64, 128, 20
    batch = 8

    key = jax.random.PRNGKey(0)
    k_u, k_i, k_uu, k_ii = jax.random.split(key, 4)

    # nn.Embedding default initialization ~ N(0, 1).
    user_factors = jax.random.normal(k_u, (n_users, n_factors), jnp.float32)
    item_factors = jax.random.normal(k_i, (n_items, n_factors), jnp.float32)

    user = jax.random.randint(k_uu, (batch,), 0, n_users, dtype=jnp.int32)
    item = jax.random.randint(k_ii, (batch,), 0, n_items, dtype=jnp.int32)

    out = neural_cf_forward(user, item, user_factors, item_factors)
    out = jax.block_until_ready(out)

    # Pure-JAX reference: (user_factors[user] * item_factors[item]).sum(1)
    ref = jnp.sum(jnp.take(user_factors, user, axis=0)
                  * jnp.take(item_factors, item, axis=0), axis=1)

    assert out.shape == (batch,)
    assert np.allclose(np.asarray(out), np.asarray(ref), rtol=1e-5, atol=1e-5)
    print("KERNEL_OK")
</pallas_src>

<mosaic_0001>
module attributes {stable_mosaic.version = 11 : i64} {
  func.func @neural_cf_kernel(%arg0: i32, %arg1: memref<1x8xi32, #tpu.memory_space<smem>>, %arg2: memref<1x8xi32, #tpu.memory_space<smem>>, %arg3: memref<64x20xf32, #tpu.memory_space<any>>, %arg4: memref<128x20xf32, #tpu.memory_space<any>>, %arg5: memref<8x1xf32, #tpu.memory_space<vmem>>, %arg6: memref<8x20xf32, #tpu.memory_space<vmem>>, %arg7: memref<8x20xf32, #tpu.memory_space<vmem>>, %arg8: memref<2x!tpu.dma_semaphore, #tpu.memory_space<semaphore_mem>>) attributes {dimension_semantics = [#tpu.dimension_semantics<parallel>], iteration_bounds = array<i64: 1>, scalar_prefetch = 2 : i64, scratch_operands = 3 : i64, tpu.core_type = #tpu.core_type<tc>, window_params = [{}, {}, {transform_indices = @transform_2, window_bounds = array<i64: 8, 1>}]} {
    %c0_i32 = arith.constant 0 : i32
    %c1_i32 = arith.constant 1 : i32
    %c0_i32_0 = arith.constant 0 : i32
    %c8_i32 = arith.constant 8 : i32
    %0 = arith.addi %c0_i32_0, %c8_i32 : i32
    %c1_i32_1 = arith.constant 1 : i32
    scf.for %arg9 = %c0_i32_0 to %0 step %c1_i32_1  : i32 {
      %8 = arith.index_cast %arg0 : i32 to index
      %9 = arith.index_cast %arg9 : i32 to index
      %10 = memref.load %arg1[%8, %9] : memref<1x8xi32, #tpu.memory_space<smem>>
      %11 = arith.index_cast %arg0 : i32 to index
      %12 = arith.index_cast %arg9 : i32 to index
      %13 = memref.load %arg2[%11, %12] : memref<1x8xi32, #tpu.memory_space<smem>>
      %c0_i32_13 = arith.constant 0 : i32
      %14 = tpu.memref_slice %arg3[%10, %c0_i32_13] : memref<64x20xf32, #tpu.memory_space<any>> -> memref<1x20xf32, #tpu.memory_space<any>>
      %c0_i32_14 = arith.constant 0 : i32
      %15 = tpu.memref_slice %arg6[%arg9, %c0_i32_14] : memref<8x20xf32, #tpu.memory_space<vmem>> -> memref<1x20xf32, #tpu.memory_space<vmem>>
      %16 = tpu.memref_slice %arg8[%c0_i32] : memref<2x!tpu.dma_semaphore, #tpu.memory_space<semaphore_mem>> -> memref<1x!tpu.dma_semaphore, #tpu.memory_space<semaphore_mem>>
      %17 = tpu.memref_squeeze %16 : memref<1x!tpu.dma_semaphore, #tpu.memory_space<semaphore_mem>> -> memref<!tpu.dma_semaphore, #tpu.memory_space<semaphore_mem>>
      tpu.enqueue_dma source(%14 : memref<1x20xf32, #tpu.memory_space<any>>) target(%15 : memref<1x20xf32, #tpu.memory_space<vmem>>) target_semaphore(%17 : memref<!tpu.dma_semaphore, #tpu.memory_space<semaphore_mem>>)
      %c0_i32_15 = arith.constant 0 : i32
      %18 = tpu.memref_slice %arg4[%13, %c0_i32_15] : memref<128x20xf32, #tpu.memory_space<any>> -> memref<1x20xf32, #tpu.memory_space<any>>
      %c0_i32_16 = arith.constant 0 : i32
      %19 = tpu.memref_slice %arg7[%arg9, %c0_i32_16] : memref<8x20xf32, #tpu.memory_space<vmem>> -> memref<1x20xf32, #tpu.memory_space<vmem>>
      %20 = tpu.memref_slice %arg8[%c1_i32] : memref<2x!tpu.dma_semaphore, #tpu.memory_space<semaphore_mem>> -> memref<1x!tpu.dma_semaphore, #tpu.memory_space<semaphore_mem>>
      %21 = tpu.memref_squeeze %20 : memref<1x!tpu.dma_semaphore, #tpu.memory_space<semaphore_mem>> -> memref<!tpu.dma_semaphore, #tpu.memory_space<semaphore_mem>>
      tpu.enqueue_dma source(%18 : memref<1x20xf32, #tpu.memory_space<any>>) target(%19 : memref<1x20xf32, #tpu.memory_space<vmem>>) target_semaphore(%21 : memref<!tpu.dma_semaphore, #tpu.memory_space<semaphore_mem>>)
    }
    %c8_i32_2 = arith.constant 8 : i32
    %c0_i32_3 = arith.constant 0 : i32
    %c1_i32_4 = arith.constant 1 : i32
    %c0_i32_5 = arith.constant 0 : i32
    %c8_i32_6 = arith.constant 8 : i32
    %1 = arith.addi %c0_i32_5, %c8_i32_6 : i32
    %c1_i32_7 = arith.constant 1 : i32
    scf.for %arg9 = %c0_i32_5 to %1 step %c1_i32_7  : i32 {
      %c0_i32_13 = arith.constant 0 : i32
      %c0_i32_14 = arith.constant 0 : i32
      %8 = tpu.memref_slice %arg3[%c0_i32_13, %c0_i32_14] : memref<64x20xf32, #tpu.memory_space<any>> -> memref<1x20xf32, #tpu.memory_space<any>>
      %c0_i32_15 = arith.constant 0 : i32
      %c0_i32_16 = arith.constant 0 : i32
      %9 = tpu.memref_slice %arg6[%c0_i32_15, %c0_i32_16] : memref<8x20xf32, #tpu.memory_space<vmem>> -> memref<1x20xf32, #tpu.memory_space<vmem>>
      %10 = tpu.memref_slice %arg8[%c0_i32_3] : memref<2x!tpu.dma_semaphore, #tpu.memory_space<semaphore_mem>> -> memref<1x!tpu.dma_semaphore, #tpu.memory_space<semaphore_mem>>
      %11 = tpu.memref_squeeze %10 : memref<1x!tpu.dma_semaphore, #tpu.memory_space<semaphore_mem>> -> memref<!tpu.dma_semaphore, #tpu.memory_space<semaphore_mem>>
      tpu.wait_dma2 semaphore(%11 : memref<!tpu.dma_semaphore, #tpu.memory_space<semaphore_mem>>) src(%8 : memref<1x20xf32, #tpu.memory_space<any>>) dst(%9 : memref<1x20xf32, #tpu.memory_space<vmem>>)
      %c0_i32_17 = arith.constant 0 : i32
      %c0_i32_18 = arith.constant 0 : i32
      %12 = tpu.memref_slice %arg4[%c0_i32_17, %c0_i32_18] : memref<128x20xf32, #tpu.memory_space<any>> -> memref<1x20xf32, #tpu.memory_space<any>>
      %c0_i32_19 = arith.constant 0 : i32
      %c0_i32_20 = arith.constant 0 : i32
      %13 = tpu.memref_slice %arg7[%c0_i32_19, %c0_i32_20] : memref<8x20xf32, #tpu.memory_space<vmem>> -> memref<1x20xf32, #tpu.memory_space<vmem>>
      %14 = tpu.memref_slice %arg8[%c1_i32_4] : memref<2x!tpu.dma_semaphore, #tpu.memory_space<semaphore_mem>> -> memref<1x!tpu.dma_semaphore, #tpu.memory_space<semaphore_mem>>
      %15 = tpu.memref_squeeze %14 : memref<1x!tpu.dma_semaphore, #tpu.memory_space<semaphore_mem>> -> memref<!tpu.dma_semaphore, #tpu.memory_space<semaphore_mem>>
      tpu.wait_dma2 semaphore(%15 : memref<!tpu.dma_semaphore, #tpu.memory_space<semaphore_mem>>) src(%12 : memref<1x20xf32, #tpu.memory_space<any>>) dst(%13 : memref<1x20xf32, #tpu.memory_space<vmem>>)
    }
    %c0 = arith.constant 0 : index
    %c0_8 = arith.constant 0 : index
    %2 = vector.load %arg6[%c0, %c0_8] : memref<8x20xf32, #tpu.memory_space<vmem>>, vector<8x20xf32>
    %c0_9 = arith.constant 0 : index
    %c0_10 = arith.constant 0 : index
    %3 = vector.load %arg7[%c0_9, %c0_10] : memref<8x20xf32, #tpu.memory_space<vmem>>, vector<8x20xf32>
    %4 = arith.mulf %2, %3 : vector<8x20xf32>
    %cst = arith.constant dense<0.000000e+00> : vector<8xf32>
    %5 = vector.multi_reduction <add>, %4, %cst [1] : vector<8x20xf32> to vector<8xf32>
    %6 = vector.shape_cast %5 : vector<8xf32> to vector<8x1xf32>
    %c0_11 = arith.constant 0 : index
    %c0_12 = arith.constant 0 : index
    %7 = vector.load %arg5[%c0_11, %c0_12] : memref<8x1xf32, #tpu.memory_space<vmem>>, vector<8x1xf32>
    tpu.vector_store %arg5[%c0_11, %c0_12], %6 {strides = array<i32>} : memref<8x1xf32, #tpu.memory_space<vmem>>, vector<8x1xf32>,
    return
  }
  func.func @transform_2(%arg0: i32, %arg1: memref<1x8xi32, #tpu.memory_space<smem>>, %arg2: memref<1x8xi32, #tpu.memory_space<smem>>) -> (i32, i32) {
    %c0_i32 = arith.constant 0 : i32
    %c0_i32_0 = arith.constant 0 : i32
    return %arg0, %c0_i32 : i32, i32
  }
}

</mosaic_0001>

<llo_original>
// kernel: tpu_custom_call.1
$region0: #{tpu_custom_call.1}
  #allocation0 [shape = 'u32[]', space=smem, size = 0x4, offset = 0x4, fixed_abs, tag = 'smem constant byte address 0x4 - core index']
  #allocation1 [shape = 'u32[144,128]{1,0:T(1,128)}', space=vmem, size = 0x12000, scoped, tag = 'internal scratch']
  #allocation2 [shape = 'f32[8,20]{1,0:T(8,128)}', space=vmem, size = 0x1000, scoped, tag = 'scratch operand']
  #allocation3 [shape = 'f32[8,20]{1,0:T(8,128)}', space=vmem, size = 0x1000, scoped, tag = 'scratch operand']
  #allocation4 [shape = 's32[2]{0}', space=sflag, size = 0x8, scoped, tag = 'scratch operand']
  #allocation5 [shape = 's32[1]{0}', space=sflag, size = 0x4, scoped, tag = 'scoped memory for tpu_custom_call.1']
  #allocation6 [shape = 'u8[512]{0}', space=smem, size = 0x200, scoped, tag = 'prefetched SMEM operand 0']
  #allocation7 [shape = 'u8[512]{0}', space=smem, size = 0x200, scoped, tag = 'prefetched SMEM operand 1']
  #allocation8 [shape = 's32[]', space=sflag, size = 0x4, offset = 0, fixed_abs, tag = 'sflag constant byte address 0x0 - dummy sync flag']
  #allocation9 [shape = 's32[]', space=sflag, size = 0x4, offset = 0, fixed_abs, tag = 'sflag constant byte address 0x0 - dummy sync flag']
  %s0 = inlined_call_operand.vmem [shape: s32[1,8], index: 0, kind: input, shape index: {}]
  %s1 = inlined_call_operand.vmem [shape: s32[1,8], index: 1, kind: input, shape index: {}]
  %s2 = inlined_call_operand.vmem [shape: f32[64,20], index: 2, kind: input, shape index: {}]
  %s3 = inlined_call_operand.vmem [shape: f32[128,20], index: 3, kind: input, shape index: {}]
  %s4 = inlined_call_operand.vmem [shape: f32[8,1], index: 4, kind: output, shape index: {}]
  %s5 = sld [smem:[#allocation0]]
  $region84: #{tpu_custom_call.1} parent=0
    _
  %s7 = ssub.s32 1, %s5
  %s8 = scalar_select 0, %s7, %s5
  %s9 = sshll.u32 %s0, 4
  %s10 = int_to_ptr.vmem [resolvable:$true] %s9
  %12 = dma.vmem_to_smem %s10, 16, [#allocation6], [#allocation5]
  %s13 = sshll.u32 %s1, 4
  %s14 = int_to_ptr.vmem [resolvable:$true] %s13
  %16 = dma.vmem_to_smem %s14, 16, [#allocation7], [#allocation5]
  %17 = dma.done [#allocation5], 32
  %18 = sfence
  loop: start=0, step=1, limit=8
  $region2: #{tpu_custom_call.1} parent=0 // loop_pre_header
    _
  $region3: #{tpu_custom_call.1} parent=0 // loop_header
    %s20 = sphi 0, %s24
    %p21 = scmp.ge.s32.totalorder %s20, 8
  $region4: #{tpu_custom_call.1} parent=0 // loop_header_branch
    %23 = sbr.rel (%p21) target = $region8
  $region5: #{tpu_custom_call.1} parent=0 // loop_body
    %s25 = sshra.s32 %s20, 7
    %s26 = sand.u32 %s20, 127
    %s27 = sadd.s32 %s25, 0
    %s28 = smul.u32 %s27, 128
    %s29 = sshra.s32 %s20, 7
    %s30 = sand.u32 %s20, 127
    %s31 = sadd.s32 %s28, %s30
    %s32 = sld [smem:[#allocation6 + %s31]]
    %s33 = sld [smem:[#allocation7 + %s31]]
    %s34 = scalar_lea.vmem %s2, %s32
    %s35 = scalar_lea.vmem [#allocation2], %s20
    %p37 = scmp.lt.u32.totalorder 1, 8
    %p38 = pneg %p37
    // Predicated region
    $region9: #{tpu_custom_call.1} parent=5 // pred_check
      _
    $region10: #{tpu_custom_call.1} parent=5 // pred_check_branch
      %40 = sbr.rel (%p37) target = $region12
    $region11: #{tpu_custom_call.1} parent=5 // pred_region
      %s55 = sand.u32 1, 7
      %p56 = scmp.eq.s32.totalorder %s55, 0
      %p57 = pneg %p56
      // Predicated region
      $region24: #{tpu_custom_call.1} parent=11 // pred_check
        _
      $region25: #{tpu_custom_call.1} parent=11 // pred_check_branch
        %59 = sbr.rel (%p56) target = $region27
      $region26: #{tpu_custom_call.1} parent=11 // pred_region
        %s60 = sand.u32 1, 7
        %s61 = ssub.s32 1, %s60
        %s62 = scalar_lea.vmem %s34, %s61
        %s63 = ssub.s32 1, %s60
        %s64 = scalar_lea.vmem %s35, %s63 [#allocation2]
        %s65 = sshllo.u32 0, %s60
        loop: start=0, step=1, limit=1
        $region28: #{tpu_custom_call.1} parent=26 // loop_pre_header
          _
        $region29: #{tpu_custom_call.1} parent=26 // loop_header
          %s67 = sphi 0, %s71
          %p68 = scmp.ge.s32.totalorder %s67, 1
          %s72 = sphi %s62, %s62
          %s73 = sphi %s64, %s64
        $region30: #{tpu_custom_call.1} parent=26 // loop_header_branch
          %70 = sbr.rel (%p68) target = $region34
        $region31: #{tpu_custom_call.1} parent=26 // loop_body
          %v74 = vld [vmem:[%s72] sm:%s65]
          %75 = vst [vmem:[%s73] sm:%s65] %v74
        $region32: #{tpu_custom_call.1} parent=26 // loop_footer
          %s71 = sadd.s32 1, %s67
        $region33: #{tpu_custom_call.1} parent=26 // loop_footer_branch
          %66 = sbr.rel target = $region29
        $region34: #{tpu_custom_call.1} parent=26 // loop_exit
          _
      $region27: #{tpu_custom_call.1} parent=11 // pred_fallthru
        _
    $region12: #{tpu_custom_call.1} parent=5 // pred_fallthru
      _
    // Predicated region
    $region13: #{tpu_custom_call.1} parent=5 // pred_check
      %p41 = pneg %p37
    $region14: #{tpu_custom_call.1} parent=5 // pred_check_branch
      %43 = sbr.rel (%p41) target = $region16
    $region15: #{tpu_custom_call.1} parent=5 // pred_region
      %s44 = sshllo.u32 0, 1
      loop: start=0, step=1, limit=1
      $region17: #{tpu_custom_call.1} parent=15 // loop_pre_header
        _
      $region18: #{tpu_custom_call.1} parent=15 // loop_header
        %s46 = sphi 0, %s50
        %p47 = scmp.ge.s32.totalorder %s46, 1
        %s51 = sphi %s34, %s34
        %s52 = sphi %s35, %s35
      $region19: #{tpu_custom_call.1} parent=15 // loop_header_branch
        %49 = sbr.rel (%p47) target = $region23
      $region20: #{tpu_custom_call.1} parent=15 // loop_body
        %v53 = vld [vmem:[%s51] sm:%s44]
        %54 = vst [vmem:[%s52] sm:%s44] %v53
      $region21: #{tpu_custom_call.1} parent=15 // loop_footer
        %s50 = sadd.s32 1, %s46
      $region22: #{tpu_custom_call.1} parent=15 // loop_footer_branch
        %45 = sbr.rel target = $region18
      $region23: #{tpu_custom_call.1} parent=15 // loop_exit
        _
    $region16: #{tpu_custom_call.1} parent=5 // pred_fallthru
      _
    // Predicated region
    $region35: #{tpu_custom_call.1} parent=5 // pred_check
      _
    $region36: #{tpu_custom_call.1} parent=5 // pred_check_branch
      %78 = sbr.rel (0) target = $region38
    $region37: #{tpu_custom_call.1} parent=5 // pred_region
      %79 = vsyncadd [#allocation4], 16
    $region38: #{tpu_custom_call.1} parent=5 // pred_fallthru
      _
    %s80 = scalar_lea.vmem %s3, %s33
    %s81 = scalar_lea.vmem [#allocation3], %s20
    %s82 = scalar_lea.sflag [#allocation4], 1
    %p84 = scmp.lt.u32.totalorder 1, 8
    %p85 = pneg %p84
    // Predicated region
    $region39: #{tpu_custom_call.1} parent=5 // pred_check
      _
    $region40: #{tpu_custom_call.1} parent=5 // pred_check_branch
      %87 = sbr.rel (%p84) target = $region42
    $region41: #{tpu_custom_call.1} parent=5 // pred_region
      %s102 = sand.u32 1, 7
      %p103 = scmp.eq.s32.totalorder %s102, 0
      %p104 = pneg %p103
      // Predicated region
      $region54: #{tpu_custom_call.1} parent=41 // pred_check
        _
      $region55: #{tpu_custom_call.1} parent=41 // pred_check_branch
        %106 = sbr.rel (%p103) target = $region57
      $region56: #{tpu_custom_call.1} parent=41 // pred_region
        %s107 = sand.u32 1, 7
        %s108 = ssub.s32 1, %s107
        %s109 = scalar_lea.vmem %s80, %s108
        %s110 = ssub.s32 1, %s107
        %s111 = scalar_lea.vmem %s81, %s110 [#allocation3]
        %s112 = sshllo.u32 0, %s107
        loop: start=0, step=1, limit=1
        $region58: #{tpu_custom_call.1} parent=56 // loop_pre_header
          _
        $region59: #{tpu_custom_call.1} parent=56 // loop_header
          %s114 = sphi 0, %s118
          %p115 = scmp.ge.s32.totalorder %s114, 1
          %s119 = sphi %s109, %s109
          %s120 = sphi %s111, %s111
        $region60: #{tpu_custom_call.1} parent=56 // loop_header_branch
          %117 = sbr.rel (%p115) target = $region64
        $region61: #{tpu_custom_call.1} parent=56 // loop_body
          %v121 = vld [vmem:[%s119] sm:%s112]
          %122 = vst [vmem:[%s120] sm:%s112] %v121
        $region62: #{tpu_custom_call.1} parent=56 // loop_footer
          %s118 = sadd.s32 1, %s114
        $region63: #{tpu_custom_call.1} parent=56 // loop_footer_branch
          %113 = sbr.rel target = $region59
        $region64: #{tpu_custom_call.1} parent=56 // loop_exit
          _
      $region57: #{tpu_custom_call.1} parent=41 // pred_fallthru
        _
    $region42: #{tpu_custom_call.1} parent=5 // pred_fallthru
      _
    // Predicated region
    $region43: #{tpu_custom_call.1} parent=5 // pred_check
      %p88 = pneg %p84
    $region44: #{tpu_custom_call.1} parent=5 // pred_check_branch
      %90 = sbr.rel (%p88) target = $region46
    $region45: #{tpu_custom_call.1} parent=5 // pred_region
      %s91 = sshllo.u32 0, 1
      loop: start=0, step=1, limit=1
      $region47: #{tpu_custom_call.1} parent=45 // loop_pre_header
        _
      $region48: #{tpu_custom_call.1} parent=45 // loop_header
        %s93 = sphi 0, %s97
        %p94 = scmp.ge.s32.totalorder %s93, 1
        %s98 = sphi %s80, %s80
        %s99 = sphi %s81, %s81
      $region49: #{tpu_custom_call.1} parent=45 // loop_header_branch
        %96 = sbr.rel (%p94) target = $region53
      $region50: #{tpu_custom_call.1} parent=45 // loop_body
        %v100 = vld [vmem:[%s98] sm:%s91]
        %101 = vst [vmem:[%s99] sm:%s91] %v100
      $region51: #{tpu_custom_call.1} parent=45 // loop_footer
        %s97 = sadd.s32 1, %s93
      $region52: #{tpu_custom_call.1} parent=45 // loop_footer_branch
        %92 = sbr.rel target = $region48
      $region53: #{tpu_custom_call.1} parent=45 // loop_exit
        _
    $region46: #{tpu_custom_call.1} parent=5 // pred_fallthru
      _
    // Predicated region
    $region65: #{tpu_custom_call.1} parent=5 // pred_check
      _
    $region66: #{tpu_custom_call.1} parent=5 // pred_check_branch
      %125 = sbr.rel (0) target = $region68
    $region67: #{tpu_custom_call.1} parent=5 // pred_region
      %126 = vsyncadd %s82, 16
    $region68: #{tpu_custom_call.1} parent=5 // pred_fallthru
      _
  $region6: #{tpu_custom_call.1} parent=0 // loop_footer
    %s24 = sadd.s32 1, %s20
  $region7: #{tpu_custom_call.1} parent=0 // loop_footer_branch
    %19 = sbr.rel target = $region3
  $region8: #{tpu_custom_call.1} parent=0 // loop_exit
    _
  loop: start=0, step=1, limit=8
  $region69: #{tpu_custom_call.1} parent=0 // loop_pre_header
    _
  $region70: #{tpu_custom_call.1} parent=0 // loop_header
    %s128 = sphi 0, %s132
    %p129 = scmp.ge.s32.totalorder %s128, 8
  $region71: #{tpu_custom_call.1} parent=0 // loop_header_branch
    %131 = sbr.rel (%p129) target = $region75
  $region72: #{tpu_custom_call.1} parent=0 // loop_body
    %s133 = smul.u32 1, 1
    %s134 = sshll.u32 %s133, 4
    %135 = dma.done [#allocation4], %s134
    %s136 = scalar_lea.sflag [#allocation4], 1
    %s137 = sshll.u32 %s133, 4
    %138 = dma.done %s136, %s137
  $region73: #{tpu_custom_call.1} parent=0 // loop_footer
    %s132 = sadd.s32 1, %s128
  $region74: #{tpu_custom_call.1} parent=0 // loop_footer_branch
    %127 = sbr.rel target = $region70
  $region75: #{tpu_custom_call.1} parent=0 // loop_exit
    _
  %v139 = vld [vmem:[#allocation2] sm:$0xff]
  %v140 = vld [vmem:[#allocation3] sm:$0xff]
  %v141 = vmul.f32 %v139, %v140
  %vm142 = vcmask 162816
  %v143 = vsel %vm142, %v141, 0.0
  %144 = vadd.xlane.f32.xlu0 %v143
  %v145 = vpop.xlane.xlu0 %144
  %vm146 = vcmask 7168
  %147 = vst.msk [vmem:[%s4] sm:$0xff] %vm146, %v145
  // Predicated region
  $region76: #{tpu_custom_call.1} parent=0 // pred_check
    _
  $region77: #{tpu_custom_call.1} parent=0 // pred_check_branch
    %149 = sbr.rel (0) target = $region79
  $region78: #{tpu_custom_call.1} parent=0 // pred_region
    _
  $region79: #{tpu_custom_call.1} parent=0 // pred_fallthru
    _
  // Predicated region
  $region80: #{tpu_custom_call.1} parent=0 // pred_check
    _
  $region81: #{tpu_custom_call.1} parent=0 // pred_check_branch
    %151 = sbr.rel (0) target = $region83
  $region82: #{tpu_custom_call.1} parent=0 // pred_region
    _
  $region83: #{tpu_custom_call.1} parent=0 // pred_fallthru
    _
  %152 = vsyncmov [#allocation4]
  %s153 = vpop.sfrf %152
  %p154 = scmp.eq.s32.totalorder %s153, 0
  %p155 = pneg %p154
  %157 = shalt.err (%p155)
  %s158 = scalar_lea.sflag [#allocation4], 1
  %159 = vsyncmov %s158
  %s160 = vpop.sfrf %159
  %p161 = scmp.eq.s32.totalorder %s160, 0
  %p162 = pneg %p161
  %164 = shalt.err (%p162)

</llo_original>
